<compile_context>
chip_gen: v7x
topology: tpu7x:2x2x1
jax: 0.10.0
libtpu: 0.0.40
codegen_flags: <defaults>
</compile_context>

<pallas_src>
import functools

import jax
import jax.numpy as jnp
from jax.experimental import pallas as pl
from jax.experimental.pallas import tpu as pltpu


def labcd_error_kernel(logits_ref, lab_ref, cnt_ref, *, total_n, tile_n, num_classes):
    i = pl.program_id(0)

    logits = logits_ref[...].astype(jnp.float32)   # (tile_n, C)
    labels = lab_ref[...]                          # (tile_n, 1) int32

    # argmax over the class axis, first occurrence on ties (matches torch.max).
    m = jnp.max(logits, axis=-1, keepdims=True)
    col = jax.lax.broadcasted_iota(jnp.int32, logits.shape, 1)
    pred = jnp.min(jnp.where(logits == m, col, num_classes),
                   axis=-1, keepdims=True)         # (tile_n, 1) int32

    # Mask rows past the true N (last block may be partial; its tail rows are
    # whatever the DMA left in VMEM and must not contribute).
    row = i * tile_n + jax.lax.broadcasted_iota(jnp.int32, (tile_n, 1), 0)
    valid = row < total_n
    mism = jnp.where(valid & (pred != labels), 1, 0).astype(jnp.int32)

    # Per-tile partial count -> own output block (no cross-step RMW, exact int).
    cnt_ref[0, 0] = jnp.sum(mism)


def lab_cd_error(out_cd, lab_cd, *, tile_n=None):
    out_cd = jnp.asarray(out_cd)
    # same squeeze rule as the PyTorch module
    if out_cd.ndim == 3 and out_cd.shape[1] == 1:
        out_cd = out_cd[:, 0, :]
    N, C = out_cd.shape
    lab = jnp.asarray(lab_cd).reshape(-1).astype(jnp.int32).reshape(N, 1)

    # Tile sizing: target ~1 MiB of logits per block (HBM-streaming regime),
    # but never (much) more rows than the array has, and always a multiple of 8.
    if tile_n is None:
        bytes_per_row = max(1, C * jnp.dtype(out_cd.dtype).itemsize)
        tile_n = max(512, min(8192, (1 << 20) // bytes_per_row))
    n_rounded = ((N + 7) // 8) * 8
    tile_n = min(tile_n, n_rounded)
    tile_n = max(8, (tile_n // 8) * 8)

    num_tiles = pl.cdiv(N, tile_n)

    kernel = functools.partial(
        labcd_error_kernel, total_n=N, tile_n=tile_n, num_classes=C)

    counts = pl.pallas_call(
        kernel,
        out_shape=jax.ShapeDtypeStruct((num_tiles, 1), jnp.int32),
        grid_spec=pltpu.PrefetchScalarGridSpec(
            num_scalar_prefetch=0,
            grid=(num_tiles,),
            in_specs=[
                pl.BlockSpec((tile_n, C), lambda i: (i, 0)),
                pl.BlockSpec((tile_n, 1), lambda i: (i, 0)),
            ],
            out_specs=pl.BlockSpec((1, 1), lambda i: (i, 0),
                                   memory_space=pltpu.SMEM),
        ),
        compiler_params=pltpu.CompilerParams(
            dimension_semantics=("parallel",)),
    )(out_cd, lab)

    # Final reduction + normalization (tiny) in plain JAX.
    # TODO(synk): the original module returns error.item() (host float); here we
    # return a device scalar and the caller applies float().
    return jnp.sum(counts).astype(jnp.float32) / N


if __name__ == "__main__":
    key = jax.random.PRNGKey(0)
    k1, k2 = jax.random.split(key)

    # small shapes consistent with the forward: N = frames = 200, C = 32
    # context-dependent classes; 3-D input with size-1 middle dim to exercise
    # the squeeze path.
    N, C = 200, 32
    out_cd = jax.random.normal(k1, (N, 1, C), dtype=jnp.float32)
    lab_cd = jax.random.randint(k2, (N,), 0, C, dtype=jnp.int32)

    err = lab_cd_error(out_cd, lab_cd)
    err = jax.block_until_ready(err)
    err_val = float(err)

    # pure-JAX reference (torch semantics)
    logits = out_cd[:, 0, :]
    ref = float(jnp.mean((jnp.argmax(logits, axis=-1) != lab_cd).astype(jnp.float32)))
    assert abs(err_val - ref) < 1e-6, (err_val, ref)

    # also exercise the multi-tile path with a partial last tile (no padding)
    err2 = float(jax.block_until_ready(lab_cd_error(out_cd, lab_cd, tile_n=64)))
    assert abs(err2 - ref) < 1e-6, (err2, ref)

    print("KERNEL_OK")
</pallas_src>

<mosaic_0001>
module attributes {stable_mosaic.version = 11 : i64} {
  func.func @labcd_error_kernel(%arg0: i32, %arg1: memref<200x32xf32, #tpu.memory_space<vmem>>, %arg2: memref<200x1xi32, #tpu.memory_space<vmem>>, %arg3: memref<1x1xi32, #tpu.memory_space<smem>>) attributes {dimension_semantics = [#tpu.dimension_semantics<parallel>], iteration_bounds = array<i64: 1>, scalar_prefetch = 0 : i64, scratch_operands = 0 : i64, tpu.core_type = #tpu.core_type<tc>, window_params = [{transform_indices = @transform_0, window_bounds = array<i64: 200, 32>}, {transform_indices = @transform_1, window_bounds = array<i64: 200, 1>}, {transform_indices = @transform_2, window_bounds = array<i64: 1, 1>}]} {
    %c0 = arith.constant 0 : index
    %c0_0 = arith.constant 0 : index
    %0 = vector.load %arg1[%c0, %c0_0] : memref<200x32xf32, #tpu.memory_space<vmem>>, vector<200x32xf32>
    %c0_1 = arith.constant 0 : index
    %c0_2 = arith.constant 0 : index
    %1 = vector.load %arg2[%c0_1, %c0_2] : memref<200x1xi32, #tpu.memory_space<vmem>>, vector<200x1xi32>
    %cst = arith.constant dense<0xFF800000> : vector<200xf32>
    %2 = vector.multi_reduction <maximumf>, %0, %cst [1] : vector<200x32xf32> to vector<200xf32>
    %3 = vector.shape_cast %2 : vector<200xf32> to vector<200x1xf32>
    %4 = tpu.iota {dimensions = array<i32: 1>} : vector<200x32xi32>
    %5 = vector.broadcast %3 : vector<200x1xf32> to vector<200x32xf32>
    %6 = arith.cmpf oeq, %0, %5 : vector<200x32xf32>
    %c32_i32 = arith.constant 32 : i32
    %7 = vector.broadcast %c32_i32 : i32 to vector<200x32xi32>
    %8 = arith.select %6, %4, %7 : vector<200x32xi1>, vector<200x32xi32>
    %cst_3 = arith.constant dense<2147483647> : vector<200xi32>
    %9 = vector.multi_reduction <minsi>, %8, %cst_3 [1] : vector<200x32xi32> to vector<200xi32>
    %10 = vector.shape_cast %9 : vector<200xi32> to vector<200x1xi32>
    %c200_i32 = arith.constant 200 : i32
    %11 = arith.muli %arg0, %c200_i32 : i32
    %12 = tpu.iota {dimensions = array<i32: 0>} : vector<200x1xi32>
    %13 = vector.broadcast %11 : i32 to vector<200x1xi32>
    %14 = arith.addi %13, %12 : vector<200x1xi32>
    %c200_i32_4 = arith.constant 200 : i32
    %15 = vector.broadcast %c200_i32_4 : i32 to vector<200x1xi32>
    %16 = arith.cmpi slt, %14, %15 : vector<200x1xi32>
    %17 = arith.cmpi ne, %10, %1 : vector<200x1xi32>
    %18 = arith.andi %16, %17 : vector<200x1xi1>
    %c1_i32 = arith.constant 1 : i32
    %c0_i32 = arith.constant 0 : i32
    %19 = vector.broadcast %c1_i32 : i32 to vector<200x1xi32>
    %20 = vector.broadcast %c0_i32 : i32 to vector<200x1xi32>
    %21 = arith.select %18, %19, %20 : vector<200x1xi1>, vector<200x1xi32>
    %22 = vector.shape_cast %21 : vector<200x1xi32> to vector<1x200x1xi32>
    %cst_5 = arith.constant dense<0> : vector<1xi32>
    %23 = vector.multi_reduction <add>, %22, %cst_5 [1, 2] : vector<1x200x1xi32> to vector<1xi32>
    %24 = vector.shape_cast %23 : vector<1xi32> to vector<1x1x1xi32>
    %25 = vector.extract %24[0, 0, 0] : i32 from vector<1x1x1xi32>
    %c0_6 = arith.constant 0 : index
    %c0_7 = arith.constant 0 : index
    %26 = memref.load %arg3[%c0_6, %c0_7] : memref<1x1xi32, #tpu.memory_space<smem>>
    memref.store %25, %arg3[%c0_6, %c0_7] : memref<1x1xi32, #tpu.memory_space<smem>>
    return
  }
  func.func @transform_0(%arg0: i32) -> (i32, i32) {
    %c0_i32 = arith.constant 0 : i32
    %c0_i32_0 = arith.constant 0 : i32
    return %arg0, %c0_i32 : i32, i32
  }
  func.func @transform_1(%arg0: i32) -> (i32, i32) {
    %c0_i32 = arith.constant 0 : i32
    %c0_i32_0 = arith.constant 0 : i32
    return %arg0, %c0_i32 : i32, i32
  }
  func.func @transform_2(%arg0: i32) -> (i32, i32) {
    %c0_i32 = arith.constant 0 : i32
    %c0_i32_0 = arith.constant 0 : i32
    return %arg0, %c0_i32 : i32, i32
  }
}

</mosaic_0001>

<llo_original>
// kernel: tpu_custom_call.1
$region0: #{tpu_custom_call.1}
  #allocation0 [shape = 'u32[]', space=smem, size = 0x4, offset = 0x4, fixed_abs, tag = 'smem constant byte address 0x4 - core index']
  #allocation1 [shape = 'u32[144,128]{1,0:T(1,128)}', space=vmem, size = 0x12000, scoped, tag = 'internal scratch']
  %s0 = inlined_call_operand.vmem [shape: f32[200,32], index: 0, kind: input, shape index: {}]
  %s1 = inlined_call_operand.vmem [shape: s32[200,1], index: 1, kind: input, shape index: {}]
  %s2 = inlined_call_operand.hbm [shape: s32[1,1], index: 2, kind: output, shape index: {}]
  %s3 = sld [smem:[#allocation0]]
  $region18: #{tpu_custom_call.1} parent=0
    _
  %s5 = ssub.s32 1, %s3
  %s6 = scalar_select 0, %s5, %s3
  $region1: #{tpu_custom_call.1} parent=0
    #allocation2 [shape = 'u8[512]{0}', space=smem, size = 0x200, scoped, tag = 'output window, operand 0, single buffered']
    #allocation3 [shape = 's32[1]{0}', space=sflag, size = 0x4, scoped, tag = 'scoped memory for tpu_custom_call.1']
    %7 = vsyncpa [#allocation3], 0
    // Predicated region
    $region2: #{tpu_custom_call.1} parent=1 // pred_check
      _
    $region3: #{tpu_custom_call.1} parent=1 // pred_check_branch
      %9 = sbr.rel (0) target = $region5
    $region4: #{tpu_custom_call.1} parent=1 // pred_region
      _
    $region5: #{tpu_custom_call.1} parent=1 // pred_fallthru
      _
    // Predicated region
    $region6: #{tpu_custom_call.1} parent=1 // pred_check
      _
    $region7: #{tpu_custom_call.1} parent=1 // pred_check_branch
      %11 = sbr.rel (0) target = $region9
    $region8: #{tpu_custom_call.1} parent=1 // pred_region
      _
    $region9: #{tpu_custom_call.1} parent=1 // pred_fallthru
      _
    %v12 = vld [vmem:[%s0] sm:$0xff]
    %v13 = vld [vmem:[%s0 + $0x8] sm:$0xff]
    %v14 = vld [vmem:[%s0 + $0x10] sm:$0xff]
    %v15 = vld [vmem:[%s0 + $0x18] sm:$0xff]
    %v16 = vld [vmem:[%s0 + $0x20] sm:$0xff]
    %v17 = vld [vmem:[%s0 + $0x28] sm:$0xff]
    %v18 = vld [vmem:[%s0 + $0x30] sm:$0xff]
    %v19 = vld [vmem:[%s0 + $0x38] sm:$0xff]
    %v20 = vld [vmem:[%s0 + $0x40] sm:$0xff]
    %v21 = vld [vmem:[%s0 + $0x48] sm:$0xff]
    %v22 = vld [vmem:[%s0 + $0x50] sm:$0xff]
    %v23 = vld [vmem:[%s0 + $0x58] sm:$0xff]
    %v24 = vld [vmem:[%s0 + $0x60] sm:$0xff]
    %v25 = vld [vmem:[%s0 + $0x68] sm:$0xff]
    %v26 = vld [vmem:[%s0 + $0x70] sm:$0xff]
    %v27 = vld [vmem:[%s0 + $0x78] sm:$0xff]
    %v28 = vld [vmem:[%s0 + $0x80] sm:$0xff]
    %v29 = vld [vmem:[%s0 + $0x88] sm:$0xff]
    %v30 = vld [vmem:[%s0 + $0x90] sm:$0xff]
    %v31 = vld [vmem:[%s0 + $0x98] sm:$0xff]
    %v32 = vld [vmem:[%s0 + $0xa0] sm:$0xff]
    %v33 = vld [vmem:[%s0 + $0xa8] sm:$0xff]
    %v34 = vld [vmem:[%s0 + $0xb0] sm:$0xff]
    %v35 = vld [vmem:[%s0 + $0xb8] sm:$0xff]
    %v36 = vld [vmem:[%s0 + $0xc0] sm:$0xff]
    %v37 = vld [vmem:[%s1] sm:$0xff]
    %v38 = vld [vmem:[%s1 + $0x8] sm:$0xff]
    %v39 = vld [vmem:[%s1 + $0x10] sm:$0xff]
    %v40 = vld [vmem:[%s1 + $0x18] sm:$0xff]
    %v41 = vld [vmem:[%s1 + $0x20] sm:$0xff]
    %v42 = vld [vmem:[%s1 + $0x28] sm:$0xff]
    %v43 = vld [vmem:[%s1 + $0x30] sm:$0xff]
    %v44 = vld [vmem:[%s1 + $0x38] sm:$0xff]
    %v45 = vld [vmem:[%s1 + $0x40] sm:$0xff]
    %v46 = vld [vmem:[%s1 + $0x48] sm:$0xff]
    %v47 = vld [vmem:[%s1 + $0x50] sm:$0xff]
    %v48 = vld [vmem:[%s1 + $0x58] sm:$0xff]
    %v49 = vld [vmem:[%s1 + $0x60] sm:$0xff]
    %v50 = vld [vmem:[%s1 + $0x68] sm:$0xff]
    %v51 = vld [vmem:[%s1 + $0x70] sm:$0xff]
    %v52 = vld [vmem:[%s1 + $0x78] sm:$0xff]
    %v53 = vld [vmem:[%s1 + $0x80] sm:$0xff]
    %v54 = vld [vmem:[%s1 + $0x88] sm:$0xff]
    %v55 = vld [vmem:[%s1 + $0x90] sm:$0xff]
    %v56 = vld [vmem:[%s1 + $0x98] sm:$0xff]
    %v57 = vld [vmem:[%s1 + $0xa0] sm:$0xff]
    %v58 = vld [vmem:[%s1 + $0xa8] sm:$0xff]
    %v59 = vld [vmem:[%s1 + $0xb0] sm:$0xff]
    %v60 = vld [vmem:[%s1 + $0xb8] sm:$0xff]
    %v61 = vld [vmem:[%s1 + $0xc0] sm:$0xff]
    %vm62 = vcmask 261120
    %v63 = vsel %vm62, %v12, -inf
    %64 = vmax.xlane.f32.xlu0 %v63
    %v65 = vpop.xlane.xlu0 %64
    %v66 = vsel %vm62, %v13, -inf
    %67 = vmax.xlane.f32.xlu0 %v66
    %v68 = vpop.xlane.xlu0 %67
    %v69 = vsel %vm62, %v14, -inf
    %70 = vmax.xlane.f32.xlu0 %v69
    %v71 = vpop.xlane.xlu0 %70
    %v72 = vsel %vm62, %v15, -inf
    %73 = vmax.xlane.f32.xlu0 %v72
    %v74 = vpop.xlane.xlu0 %73
    %v75 = vsel %vm62, %v16, -inf
    %76 = vmax.xlane.f32.xlu0 %v75
    %v77 = vpop.xlane.xlu0 %76
    %v78 = vsel %vm62, %v17, -inf
    %79 = vmax.xlane.f32.xlu0 %v78
    %v80 = vpop.xlane.xlu0 %79
    %v81 = vsel %vm62, %v18, -inf
    %82 = vmax.xlane.f32.xlu0 %v81
    %v83 = vpop.xlane.xlu0 %82
    %v84 = vsel %vm62, %v19, -inf
    %85 = vmax.xlane.f32.xlu0 %v84
    %v86 = vpop.xlane.xlu0 %85
    %v87 = vsel %vm62, %v20, -inf
    %88 = vmax.xlane.f32.xlu0 %v87
    %v89 = vpop.xlane.xlu0 %88
    %v90 = vsel %vm62, %v21, -inf
    %91 = vmax.xlane.f32.xlu0 %v90
    %v92 = vpop.xlane.xlu0 %91
    %v93 = vsel %vm62, %v22, -inf
    %94 = vmax.xlane.f32.xlu0 %v93
    %v95 = vpop.xlane.xlu0 %94
    %v96 = vsel %vm62, %v23, -inf
    %97 = vmax.xlane.f32.xlu0 %v96
    %v98 = vpop.xlane.xlu0 %97
    %v99 = vsel %vm62, %v24, -inf
    %100 = vmax.xlane.f32.xlu0 %v99
    %v101 = vpop.xlane.xlu0 %100
    %v102 = vsel %vm62, %v25, -inf
    %103 = vmax.xlane.f32.xlu0 %v102
    %v104 = vpop.xlane.xlu0 %103
    %v105 = vsel %vm62, %v26, -inf
    %106 = vmax.xlane.f32.xlu0 %v105
    %v107 = vpop.xlane.xlu0 %106
    %v108 = vsel %vm62, %v27, -inf
    %109 = vmax.xlane.f32.xlu0 %v108
    %v110 = vpop.xlane.xlu0 %109
    %v111 = vsel %vm62, %v28, -inf
    %112 = vmax.xlane.f32.xlu0 %v111
    %v113 = vpop.xlane.xlu0 %112
    %v114 = vsel %vm62, %v29, -inf
    %115 = vmax.xlane.f32.xlu0 %v114
    %v116 = vpop.xlane.xlu0 %115
    %v117 = vsel %vm62, %v30, -inf
    %118 = vmax.xlane.f32.xlu0 %v117
    %v119 = vpop.xlane.xlu0 %118
    %v120 = vsel %vm62, %v31, -inf
    %121 = vmax.xlane.f32.xlu0 %v120
    %v122 = vpop.xlane.xlu0 %121
    %v123 = vsel %vm62, %v32, -inf
    %124 = vmax.xlane.f32.xlu0 %v123
    %v125 = vpop.xlane.xlu0 %124
    %v126 = vsel %vm62, %v33, -inf
    %127 = vmax.xlane.f32.xlu0 %v126
    %v128 = vpop.xlane.xlu0 %127
    %v129 = vsel %vm62, %v34, -inf
    %130 = vmax.xlane.f32.xlu0 %v129
    %v131 = vpop.xlane.xlu0 %130
    %v132 = vsel %vm62, %v35, -inf
    %133 = vmax.xlane.f32.xlu0 %v132
    %v134 = vpop.xlane.xlu0 %133
    %v135 = vsel %vm62, %v36, -inf
    %136 = vmax.xlane.f32.xlu0 %v135
    %v137 = vpop.xlane.xlu0 %136
    %v138 = vlaneseq
    %v139 = vand.u32 %v138, 127
    %vm140 = vcmp.eq.f32.partialorder %v12, %v65
    %vm141 = vcmp.eq.f32.partialorder %v13, %v68
    %vm142 = vcmp.eq.f32.partialorder %v14, %v71
    %vm143 = vcmp.eq.f32.partialorder %v15, %v74
    %vm144 = vcmp.eq.f32.partialorder %v16, %v77
    %vm145 = vcmp.eq.f32.partialorder %v17, %v80
    %vm146 = vcmp.eq.f32.partialorder %v18, %v83
    %vm147 = vcmp.eq.f32.partialorder %v19, %v86
    %vm148 = vcmp.eq.f32.partialorder %v20, %v89
    %vm149 = vcmp.eq.f32.partialorder %v21, %v92
    %vm150 = vcmp.eq.f32.partialorder %v22, %v95
    %vm151 = vcmp.eq.f32.partialorder %v23, %v98
    %vm152 = vcmp.eq.f32.partialorder %v24, %v101
    %vm153 = vcmp.eq.f32.partialorder %v25, %v104
    %vm154 = vcmp.eq.f32.partialorder %v26, %v107
    %vm155 = vcmp.eq.f32.partialorder %v27, %v110
    %vm156 = vcmp.eq.f32.partialorder %v28, %v113
    %vm157 = vcmp.eq.f32.partialorder %v29, %v116
    %vm158 = vcmp.eq.f32.partialorder %v30, %v119
    %vm159 = vcmp.eq.f32.partialorder %v31, %v122
    %vm160 = vcmp.eq.f32.partialorder %v32, %v125
    %vm161 = vcmp.eq.f32.partialorder %v33, %v128
    %vm162 = vcmp.eq.f32.partialorder %v34, %v131
    %vm163 = vcmp.eq.f32.partialorder %v35, %v134
    %vm164 = vcmp.eq.f32.partialorder %v36, %v137
    %v165 = vsel %vm140, %v139, 32
    %v166 = vsel %vm141, %v139, 32
    %v167 = vsel %vm142, %v139, 32
    %v168 = vsel %vm143, %v139, 32
    %v169 = vsel %vm144, %v139, 32
    %v170 = vsel %vm145, %v139, 32
    %v171 = vsel %vm146, %v139, 32
    %v172 = vsel %vm147, %v139, 32
    %v173 = vsel %vm148, %v139, 32
    %v174 = vsel %vm149, %v139, 32
    %v175 = vsel %vm150, %v139, 32
    %v176 = vsel %vm151, %v139, 32
    %v177 = vsel %vm152, %v139, 32
    %v178 = vsel %vm153, %v139, 32
    %v179 = vsel %vm154, %v139, 32
    %v180 = vsel %vm155, %v139, 32
    %v181 = vsel %vm156, %v139, 32
    %v182 = vsel %vm157, %v139, 32
    %v183 = vsel %vm158, %v139, 32
    %v184 = vsel %vm159, %v139, 32
    %v185 = vsel %vm160, %v139, 32
    %v186 = vsel %vm161, %v139, 32
    %v187 = vsel %vm162, %v139, 32
    %v188 = vsel %vm163, %v139, 32
    %v189 = vsel %vm164, %v139, 32
    %v190 = vsel %vm62, %v165, 2147483647
    %v191 = vand.u32 %v190, 65535
    %v192 = vshra.s32 %v190, 16
    %v193 = vcvt.s32.f32 %v191
    %v194 = vcvt.s32.f32 %v192
    %195 = vmin.xlane.f32.xlu0 %v194
    %v196 = vpop.xlane.xlu0 %195
    %vm197 = vcmp.eq.f32.partialorder %v194, %v196
    %v198 = vsel %vm197, %v193, inf
    %199 = vmin.xlane.f32.xlu0 %v198
    %v200 = vpop.xlane.xlu0 %199
    %v201 = vcvt.f32.s32 %v200
    %v202 = vcvt.f32.s32 %v196
    %v203 = vshll.u32 %v202, 16
    %v204 = vadd.s32 %v203, %v201
    %v205 = vsel %vm62, %v166, 2147483647
    %v206 = vand.u32 %v205, 65535
    %v207 = vshra.s32 %v205, 16
    %v208 = vcvt.s32.f32 %v206
    %v209 = vcvt.s32.f32 %v207
    %210 = vmin.xlane.f32.xlu0 %v209
    %v211 = vpop.xlane.xlu0 %210
    %vm212 = vcmp.eq.f32.partialorder %v209, %v211
    %v213 = vsel %vm212, %v208, inf
    %214 = vmin.xlane.f32.xlu0 %v213
    %v215 = vpop.xlane.xlu0 %214
    %v216 = vcvt.f32.s32 %v215
    %v217 = vcvt.f32.s32 %v211
    %v218 = vshll.u32 %v217, 16
    %v219 = vadd.s32 %v218, %v216
    %v220 = vsel %vm62, %v167, 2147483647
    %v221 = vand.u32 %v220, 65535
    %v222 = vshra.s32 %v220, 16
    %v223 = vcvt.s32.f32 %v221
    %v224 = vcvt.s32.f32 %v222
    %225 = vmin.xlane.f32.xlu0 %v224
    %v226 = vpop.xlane.xlu0 %225
    %vm227 = vcmp.eq.f32.partialorder %v224, %v226
    %v228 = vsel %vm227, %v223, inf
    %229 = vmin.xlane.f32.xlu0 %v228
    %v230 = vpop.xlane.xlu0 %229
    %v231 = vcvt.f32.s32 %v230
    %v232 = vcvt.f32.s32 %v226
    %v233 = vshll.u32 %v232, 16
    %v234 = vadd.s32 %v233, %v231
    %v235 = vsel %vm62, %v168, 2147483647
    %v236 = vand.u32 %v235, 65535
    %v237 = vshra.s32 %v235, 16
    %v238 = vcvt.s32.f32 %v236
    %v239 = vcvt.s32.f32 %v237
    %240 = vmin.xlane.f32.xlu0 %v239
    %v241 = vpop.xlane.xlu0 %240
    %vm242 = vcmp.eq.f32.partialorder %v239, %v241
    %v243 = vsel %vm242, %v238, inf
    %244 = vmin.xlane.f32.xlu0 %v243
    %v245 = vpop.xlane.xlu0 %244
    %v246 = vcvt.f32.s32 %v245
    %v247 = vcvt.f32.s32 %v241
    %v248 = vshll.u32 %v247, 16
    %v249 = vadd.s32 %v248, %v246
    %v250 = vsel %vm62, %v169, 2147483647
    %v251 = vand.u32 %v250, 65535
    %v252 = vshra.s32 %v250, 16
    %v253 = vcvt.s32.f32 %v251
    %v254 = vcvt.s32.f32 %v252
    %255 = vmin.xlane.f32.xlu0 %v254
    %v256 = vpop.xlane.xlu0 %255
    %vm257 = vcmp.eq.f32.partialorder %v254, %v256
    %v258 = vsel %vm257, %v253, inf
    %259 = vmin.xlane.f32.xlu0 %v258
    %v260 = vpop.xlane.xlu0 %259
    %v261 = vcvt.f32.s32 %v260
    %v262 = vcvt.f32.s32 %v256
    %v263 = vshll.u32 %v262, 16
    %v264 = vadd.s32 %v263, %v261
    %v265 = vsel %vm62, %v170, 2147483647
    %v266 = vand.u32 %v265, 65535
    %v267 = vshra.s32 %v265, 16
    %v268 = vcvt.s32.f32 %v266
    %v269 = vcvt.s32.f32 %v267
    %270 = vmin.xlane.f32.xlu0 %v269
    %v271 = vpop.xlane.xlu0 %270
    %vm272 = vcmp.eq.f32.partialorder %v269, %v271
    %v273 = vsel %vm272, %v268, inf
    %274 = vmin.xlane.f32.xlu0 %v273
    %v275 = vpop.xlane.xlu0 %274
    %v276 = vcvt.f32.s32 %v275
    %v277 = vcvt.f32.s32 %v271
    %v278 = vshll.u32 %v277, 16
    %v279 = vadd.s32 %v278, %v276
    %v280 = vsel %vm62, %v171, 2147483647
    %v281 = vand.u32 %v280, 65535
    %v282 = vshra.s32 %v280, 16
    %v283 = vcvt.s32.f32 %v281
    %v284 = vcvt.s32.f32 %v282
    %285 = vmin.xlane.f32.xlu0 %v284
    %v286 = vpop.xlane.xlu0 %285
    %vm287 = vcmp.eq.f32.partialorder %v284, %v286
    %v288 = vsel %vm287, %v283, inf
    %289 = vmin.xlane.f32.xlu0 %v288
    %v290 = vpop.xlane.xlu0 %289
    %v291 = vcvt.f32.s32 %v290
    %v292 = vcvt.f32.s32 %v286
    %v293 = vshll.u32 %v292, 16
    %v294 = vadd.s32 %v293, %v291
    %v295 = vsel %vm62, %v172, 2147483647
    %v296 = vand.u32 %v295, 65535
    %v297 = vshra.s32 %v295, 16
    %v298 = vcvt.s32.f32 %v296
    %v299 = vcvt.s32.f32 %v297
    %300 = vmin.xlane.f32.xlu0 %v299
    %v301 = vpop.xlane.xlu0 %300
    %vm302 = vcmp.eq.f32.partialorder %v299, %v301
    %v303 = vsel %vm302, %v298, inf
    %304 = vmin.xlane.f32.xlu0 %v303
    %v305 = vpop.xlane.xlu0 %304
    %v306 = vcvt.f32.s32 %v305
    %v307 = vcvt.f32.s32 %v301
    %v308 = vshll.u32 %v307, 16
    %v309 = vadd.s32 %v308, %v306
    %v310 = vsel %vm62, %v173, 2147483647
    %v311 = vand.u32 %v310, 65535
    %v312 = vshra.s32 %v310, 16
    %v313 = vcvt.s32.f32 %v311
    %v314 = vcvt.s32.f32 %v312
    %315 = vmin.xlane.f32.xlu0 %v314
    %v316 = vpop.xlane.xlu0 %315
    %vm317 = vcmp.eq.f32.partialorder %v314, %v316
    %v318 = vsel %vm317, %v313, inf
    %319 = vmin.xlane.f32.xlu0 %v318
    %v320 = vpop.xlane.xlu0 %319
    %v321 = vcvt.f32.s32 %v320
    %v322 = vcvt.f32.s32 %v316
    %v323 = vshll.u32 %v322, 16
    %v324 = vadd.s32 %v323, %v321
    %v325 = vsel %vm62, %v174, 2147483647
    %v326 = vand.u32 %v325, 65535
    %v327 = vshra.s32 %v325, 16
    %v328 = vcvt.s32.f32 %v326
    %v329 = vcvt.s32.f32 %v327
    %330 = vmin.xlane.f32.xlu0 %v329
    %v331 = vpop.xlane.xlu0 %330
    %vm332 = vcmp.eq.f32.partialorder %v329, %v331
    %v333 = vsel %vm332, %v328, inf
    %334 = vmin.xlane.f32.xlu0 %v333
    %v335 = vpop.xlane.xlu0 %334
    %v336 = vcvt.f32.s32 %v335
    %v337 = vcvt.f32.s32 %v331
    %v338 = vshll.u32 %v337, 16
    %v339 = vadd.s32 %v338, %v336
    %v340 = vsel %vm62, %v175, 2147483647
    %v341 = vand.u32 %v340, 65535
    %v342 = vshra.s32 %v340, 16
    %v343 = vcvt.s32.f32 %v341
    %v344 = vcvt.s32.f32 %v342
    %345 = vmin.xlane.f32.xlu0 %v344
    %v346 = vpop.xlane.xlu0 %345
    %vm347 = vcmp.eq.f32.partialorder %v344, %v346
    %v348 = vsel %vm347, %v343, inf
    %349 = vmin.xlane.f32.xlu0 %v348
    %v350 = vpop.xlane.xlu0 %349
    %v351 = vcvt.f32.s32 %v350
    %v352 = vcvt.f32.s32 %v346
    %v353 = vshll.u32 %v352, 16
    %v354 = vadd.s32 %v353, %v351
    %v355 = vsel %vm62, %v176, 2147483647
    %v356 = vand.u32 %v355, 65535
    %v357 = vshra.s32 %v355, 16
    %v358 = vcvt.s32.f32 %v356
    %v359 = vcvt.s32.f32 %v357
    %360 = vmin.xlane.f32.xlu0 %v359
    %v361 = vpop.xlane.xlu0 %360
    %vm362 = vcmp.eq.f32.partialorder %v359, %v361
    %v363 = vsel %vm362, %v358, inf
    %364 = vmin.xlane.f32.xlu0 %v363
    %v365 = vpop.xlane.xlu0 %364
    %v366 = vcvt.f32.s32 %v365
    %v367 = vcvt.f32.s32 %v361
    %v368 = vshll.u32 %v367, 16
    %v369 = vadd.s32 %v368, %v366
    %v370 = vsel %vm62, %v177, 2147483647
    %v371 = vand.u32 %v370, 65535
    %v372 = vshra.s32 %v370, 16
    %v373 = vcvt.s32.f32 %v371
    %v374 = vcvt.s32.f32 %v372
    %375 = vmin.xlane.f32.xlu0 %v374
    %v376 = vpop.xlane.xlu0 %375
    %vm377 = vcmp.eq.f32.partialorder %v374, %v376
    %v378 = vsel %vm377, %v373, inf
    %379 = vmin.xlane.f32.xlu0 %v378
    %v380 = vpop.xlane.xlu0 %379
    %v381 = vcvt.f32.s32 %v380
    %v382 = vcvt.f32.s32 %v376
    %v383 = vshll.u32 %v382, 16
    %v384 = vadd.s32 %v383, %v381
    %v385 = vsel %vm62, %v178, 2147483647
    %v386 = vand.u32 %v385, 65535
    %v387 = vshra.s32 %v385, 16
    %v388 = vcvt.s32.f32 %v386
    %v389 = vcvt.s32.f32 %v387
    %390 = vmin.xlane.f32.xlu0 %v389
    %v391 = vpop.xlane.xlu0 %390
    %vm392 = vcmp.eq.f32.partialorder %v389, %v391
    %v393 = vsel %vm392, %v388, inf
    %394 = vmin.xlane.f32.xlu0 %v393
    %v395 = vpop.xlane.xlu0 %394
    %v396 = vcvt.f32.s32 %v395
    %v397 = vcvt.f32.s32 %v391
    %v398 = vshll.u32 %v397, 16
    %v399 = vadd.s32 %v398, %v396
    %v400 = vsel %vm62, %v179, 2147483647
    %v401 = vand.u32 %v400, 65535
    %v402 = vshra.s32 %v400, 16
    %v403 = vcvt.s32.f32 %v401
    %v404 = vcvt.s32.f32 %v402
    %405 = vmin.xlane.f32.xlu0 %v404
    %v406 = vpop.xlane.xlu0 %405
    %vm407 = vcmp.eq.f32.partialorder %v404, %v406
    %v408 = vsel %vm407, %v403, inf
    %409 = vmin.xlane.f32.xlu0 %v408
    %v410 = vpop.xlane.xlu0 %409
    %v411 = vcvt.f32.s32 %v410
    %v412 = vcvt.f32.s32 %v406
    %v413 = vshll.u32 %v412, 16
    %v414 = vadd.s32 %v413, %v411
    %v415 = vsel %vm62, %v180, 2147483647
    %v416 = vand.u32 %v415, 65535
    %v417 = vshra.s32 %v415, 16
    %v418 = vcvt.s32.f32 %v416
    %v419 = vcvt.s32.f32 %v417
    %420 = vmin.xlane.f32.xlu0 %v419
    %v421 = vpop.xlane.xlu0 %420
    %vm422 = vcmp.eq.f32.partialorder %v419, %v421
    %v423 = vsel %vm422, %v418, inf
    %424 = vmin.xlane.f32.xlu0 %v423
    %v425 = vpop.xlane.xlu0 %424
    %v426 = vcvt.f32.s32 %v425
    %v427 = vcvt.f32.s32 %v421
    %v428 = vshll.u32 %v427, 16
    %v429 = vadd.s32 %v428, %v426
    %v430 = vsel %vm62, %v181, 2147483647
    %v431 = vand.u32 %v430, 65535
    %v432 = vshra.s32 %v430, 16
    %v433 = vcvt.s32.f32 %v431
    %v434 = vcvt.s32.f32 %v432
    %435 = vmin.xlane.f32.xlu0 %v434
    %v436 = vpop.xlane.xlu0 %435
    %vm437 = vcmp.eq.f32.partialorder %v434, %v436
    %v438 = vsel %vm437, %v433, inf
    %439 = vmin.xlane.f32.xlu0 %v438
    %v440 = vpop.xlane.xlu0 %439
    %v441 = vcvt.f32.s32 %v440
    %v442 = vcvt.f32.s32 %v436
    %v443 = vshll.u32 %v442, 16
    %v444 = vadd.s32 %v443, %v441
    %v445 = vsel %vm62, %v182, 2147483647
    %v446 = vand.u32 %v445, 65535
    %v447 = vshra.s32 %v445, 16
    %v448 = vcvt.s32.f32 %v446
    %v449 = vcvt.s32.f32 %v447
    %450 = vmin.xlane.f32.xlu0 %v449
    %v451 = vpop.xlane.xlu0 %450
    %vm452 = vcmp.eq.f32.partialorder %v449, %v451
    %v453 = vsel %vm452, %v448, inf
    %454 = vmin.xlane.f32.xlu0 %v453
    %v455 = vpop.xlane.xlu0 %454
    %v456 = vcvt.f32.s32 %v455
    %v457 = vcvt.f32.s32 %v451
    %v458 = vshll.u32 %v457, 16
    %v459 = vadd.s32 %v458, %v456
    %v460 = vsel %vm62, %v183, 2147483647
    %v461 = vand.u32 %v460, 65535
    %v462 = vshra.s32 %v460, 16
    %v463 = vcvt.s32.f32 %v461
    %v464 = vcvt.s32.f32 %v462
    %465 = vmin.xlane.f32.xlu0 %v464
    %v466 = vpop.xlane.xlu0 %465
    %vm467 = vcmp.eq.f32.partialorder %v464, %v466
    %v468 = vsel %vm467, %v463, inf
    %469 = vmin.xlane.f32.xlu0 %v468
    %v470 = vpop.xlane.xlu0 %469
    %v471 = vcvt.f32.s32 %v470
    %v472 = vcvt.f32.s32 %v466
    %v473 = vshll.u32 %v472, 16
    %v474 = vadd.s32 %v473, %v471
    %v475 = vsel %vm62, %v184, 2147483647
    %v476 = vand.u32 %v475, 65535
    %v477 = vshra.s32 %v475, 16
    %v478 = vcvt.s32.f32 %v476
    %v479 = vcvt.s32.f32 %v477
    %480 = vmin.xlane.f32.xlu0 %v479
    %v481 = vpop.xlane.xlu0 %480
    %vm482 = vcmp.eq.f32.partialorder %v479, %v481
    %v483 = vsel %vm482, %v478, inf
    %484 = vmin.xlane.f32.xlu0 %v483
    %v485 = vpop.xlane.xlu0 %484
    %v486 = vcvt.f32.s32 %v485
    %v487 = vcvt.f32.s32 %v481
    %v488 = vshll.u32 %v487, 16
    %v489 = vadd.s32 %v488, %v486
    %v490 = vsel %vm62, %v185, 2147483647
    %v491 = vand.u32 %v490, 65535
    %v492 = vshra.s32 %v490, 16
    %v493 = vcvt.s32.f32 %v491
    %v494 = vcvt.s32.f32 %v492
    %495 = vmin.xlane.f32.xlu0 %v494
    %v496 = vpop.xlane.xlu0 %495
    %vm497 = vcmp.eq.f32.partialorder %v494, %v496
    %v498 = vsel %vm497, %v493, inf
    %499 = vmin.xlane.f32.xlu0 %v498
    %v500 = vpop.xlane.xlu0 %499
    %v501 = vcvt.f32.s32 %v500
    %v502 = vcvt.f32.s32 %v496
    %v503 = vshll.u32 %v502, 16
    %v504 = vadd.s32 %v503, %v501
    %v505 = vsel %vm62, %v186, 2147483647
    %v506 = vand.u32 %v505, 65535
    %v507 = vshra.s32 %v505, 16
    %v508 = vcvt.s32.f32 %v506
    %v509 = vcvt.s32.f32 %v507
    %510 = vmin.xlane.f32.xlu0 %v509
    %v511 = vpop.xlane.xlu0 %510
    %vm512 = vcmp.eq.f32.partialorder %v509, %v511
    %v513 = vsel %vm512, %v508, inf
    %514 = vmin.xlane.f32.xlu0 %v513
    %v515 = vpop.xlane.xlu0 %514
    %v516 = vcvt.f32.s32 %v515
    %v517 = vcvt.f32.s32 %v511
    %v518 = vshll.u32 %v517, 16
    %v519 = vadd.s32 %v518, %v516
    %v520 = vsel %vm62, %v187, 2147483647
    %v521 = vand.u32 %v520, 65535
    %v522 = vshra.s32 %v520, 16
    %v523 = vcvt.s32.f32 %v521
    %v524 = vcvt.s32.f32 %v522
    %525 = vmin.xlane.f32.xlu0 %v524
    %v526 = vpop.xlane.xlu0 %525
    %vm527 = vcmp.eq.f32.partialorder %v524, %v526
    %v528 = vsel %vm527, %v523, inf
    %529 = vmin.xlane.f32.xlu0 %v528
    %v530 = vpop.xlane.xlu0 %529
    %v531 = vcvt.f32.s32 %v530
    %v532 = vcvt.f32.s32 %v526
    %v533 = vshll.u32 %v532, 16
    %v534 = vadd.s32 %v533, %v531
    %v535 = vsel %vm62, %v188, 2147483647
    %v536 = vand.u32 %v535, 65535
    %v537 = vshra.s32 %v535, 16
    %v538 = vcvt.s32.f32 %v536
    %v539 = vcvt.s32.f32 %v537
    %540 = vmin.xlane.f32.xlu0 %v539
    %v541 = vpop.xlane.xlu0 %540
    %vm542 = vcmp.eq.f32.partialorder %v539, %v541
    %v543 = vsel %vm542, %v538, inf
    %544 = vmin.xlane.f32.xlu0 %v543
    %v545 = vpop.xlane.xlu0 %544
    %v546 = vcvt.f32.s32 %v545
    %v547 = vcvt.f32.s32 %v541
    %v548 = vshll.u32 %v547, 16
    %v549 = vadd.s32 %v548, %v546
    %v550 = vsel %vm62, %v189, 2147483647
    %v551 = vand.u32 %v550, 65535
    %v552 = vshra.s32 %v550, 16
    %v553 = vcvt.s32.f32 %v551
    %v554 = vcvt.s32.f32 %v552
    %555 = vmin.xlane.f32.xlu0 %v554
    %v556 = vpop.xlane.xlu0 %555
    %vm557 = vcmp.eq.f32.partialorder %v554, %v556
    %v558 = vsel %vm557, %v553, inf
    %559 = vmin.xlane.f32.xlu0 %v558
    %v560 = vpop.xlane.xlu0 %559
    %v561 = vcvt.f32.s32 %v560
    %v562 = vcvt.f32.s32 %v556
    %v563 = vshll.u32 %v562, 16
    %v564 = vadd.s32 %v563, %v561
    %s565 = smul.u32 0, 200
    %v566 = vlaneseq
    %v567 = vshrl.u32 %v566, 7
    %v568 = vadd.s32 %v567, 8
    %v569 = vadd.s32 %v567, 16
    %v570 = vadd.s32 %v567, 24
    %v571 = vadd.s32 %v567, 32
    %v572 = vadd.s32 %v567, 40
    %v573 = vadd.s32 %v567, 48
    %v574 = vadd.s32 %v567, 56
    %v575 = vadd.s32 %v567, 64
    %v576 = vadd.s32 %v567, 72
    %v577 = vadd.s32 %v567, 80
    %v578 = vadd.s32 %v567, 88
    %v579 = vadd.s32 %v567, 96
    %v580 = vadd.s32 %v567, 104
    %v581 = vadd.s32 %v567, 112
    %v582 = vadd.s32 %v567, 120
    %v583 = vadd.s32 %v567, 128
    %v584 = vadd.s32 %v567, 136
    %v585 = vadd.s32 %v567, 144
    %v586 = vadd.s32 %v567, 152
    %v587 = vadd.s32 %v567, 160
    %v588 = vadd.s32 %v567, 168
    %v589 = vadd.s32 %v567, 176
    %v590 = vadd.s32 %v567, 184
    %v591 = vadd.s32 %v567, 192
    %v592 = vstv %s565
    %v593 = vadd.s32 %v592, %v567
    %v594 = vadd.s32 %v592, %v568
    %v595 = vadd.s32 %v592, %v569
    %v596 = vadd.s32 %v592, %v570
    %v597 = vadd.s32 %v592, %v571
    %v598 = vadd.s32 %v592, %v572
    %v599 = vadd.s32 %v592, %v573
    %v600 = vadd.s32 %v592, %v574
    %v601 = vadd.s32 %v592, %v575
    %v602 = vadd.s32 %v592, %v576
    %v603 = vadd.s32 %v592, %v577
    %v604 = vadd.s32 %v592, %v578
    %v605 = vadd.s32 %v592, %v579
    %v606 = vadd.s32 %v592, %v580
    %v607 = vadd.s32 %v592, %v581
    %v608 = vadd.s32 %v592, %v582
    %v609 = vadd.s32 %v592, %v583
    %v610 = vadd.s32 %v592, %v584
    %v611 = vadd.s32 %v592, %v585
    %v612 = vadd.s32 %v592, %v586
    %v613 = vadd.s32 %v592, %v587
    %v614 = vadd.s32 %v592, %v588
    %v615 = vadd.s32 %v592, %v589
    %v616 = vadd.s32 %v592, %v590
    %v617 = vadd.s32 %v592, %v591
    %vm618 = vcmp.lt.s32.totalorder %v593, 200
    %vm619 = vcmp.lt.s32.totalorder %v594, 200
    %vm620 = vcmp.lt.s32.totalorder %v595, 200
    %vm621 = vcmp.lt.s32.totalorder %v596, 200
    %vm622 = vcmp.lt.s32.totalorder %v597, 200
    %vm623 = vcmp.lt.s32.totalorder %v598, 200
    %vm624 = vcmp.lt.s32.totalorder %v599, 200
    %vm625 = vcmp.lt.s32.totalorder %v600, 200
    %vm626 = vcmp.lt.s32.totalorder %v601, 200
    %vm627 = vcmp.lt.s32.totalorder %v602, 200
    %vm628 = vcmp.lt.s32.totalorder %v603, 200
    %vm629 = vcmp.lt.s32.totalorder %v604, 200
    %vm630 = vcmp.lt.s32.totalorder %v605, 200
    %vm631 = vcmp.lt.s32.totalorder %v606, 200
    %vm632 = vcmp.lt.s32.totalorder %v607, 200
    %vm633 = vcmp.lt.s32.totalorder %v608, 200
    %vm634 = vcmp.lt.s32.totalorder %v609, 200
    %vm635 = vcmp.lt.s32.totalorder %v610, 200
    %vm636 = vcmp.lt.s32.totalorder %v611, 200
    %vm637 = vcmp.lt.s32.totalorder %v612, 200
    %vm638 = vcmp.lt.s32.totalorder %v613, 200
    %vm639 = vcmp.lt.s32.totalorder %v614, 200
    %vm640 = vcmp.lt.s32.totalorder %v615, 200
    %vm641 = vcmp.lt.s32.totalorder %v616, 200
    %vm642 = vcmp.lt.s32.totalorder %v617, 200
    %vm643 = vcmp.ne.s32.totalorder %v204, %v37
    %vm644 = vcmp.ne.s32.totalorder %v219, %v38
    %vm645 = vcmp.ne.s32.totalorder %v234, %v39
    %vm646 = vcmp.ne.s32.totalorder %v249, %v40
    %vm647 = vcmp.ne.s32.totalorder %v264, %v41
    %vm648 = vcmp.ne.s32.totalorder %v279, %v42
    %vm649 = vcmp.ne.s32.totalorder %v294, %v43
    %vm650 = vcmp.ne.s32.totalorder %v309, %v44
    %vm651 = vcmp.ne.s32.totalorder %v324, %v45
    %vm652 = vcmp.ne.s32.totalorder %v339, %v46
    %vm653 = vcmp.ne.s32.totalorder %v354, %v47
    %vm654 = vcmp.ne.s32.totalorder %v369, %v48
    %vm655 = vcmp.ne.s32.totalorder %v384, %v49
    %vm656 = vcmp.ne.s32.totalorder %v399, %v50
    %vm657 = vcmp.ne.s32.totalorder %v414, %v51
    %vm658 = vcmp.ne.s32.totalorder %v429, %v52
    %vm659 = vcmp.ne.s32.totalorder %v444, %v53
    %vm660 = vcmp.ne.s32.totalorder %v459, %v54
    %vm661 = vcmp.ne.s32.totalorder %v474, %v55
    %vm662 = vcmp.ne.s32.totalorder %v489, %v56
    %vm663 = vcmp.ne.s32.totalorder %v504, %v57
    %vm664 = vcmp.ne.s32.totalorder %v519, %v58
    %vm665 = vcmp.ne.s32.totalorder %v534, %v59
    %vm666 = vcmp.ne.s32.totalorder %v549, %v60
    %vm667 = vcmp.ne.s32.totalorder %v564, %v61
    %vm668 = vmand %vm618, %vm643
    %vm669 = vmand %vm619, %vm644
    %vm670 = vmand %vm620, %vm645
    %vm671 = vmand %vm621, %vm646
    %vm672 = vmand %vm622, %vm647
    %vm673 = vmand %vm623, %vm648
    %vm674 = vmand %vm624, %vm649
    %vm675 = vmand %vm625, %vm650
    %vm676 = vmand %vm626, %vm651
    %vm677 = vmand %vm627, %vm652
    %vm678 = vmand %vm628, %vm653
    %vm679 = vmand %vm629, %vm654
    %vm680 = vmand %vm630, %vm655
    %vm681 = vmand %vm631, %vm656
    %vm682 = vmand %vm632, %vm657
    %vm683 = vmand %vm633, %vm658
    %vm684 = vmand %vm634, %vm659
    %vm685 = vmand %vm635, %vm660
    %vm686 = vmand %vm636, %vm661
    %vm687 = vmand %vm637, %vm662
    %vm688 = vmand %vm638, %vm663
    %vm689 = vmand %vm639, %vm664
    %vm690 = vmand %vm640, %vm665
    %vm691 = vmand %vm641, %vm666
    %vm692 = vmand %vm642, %vm667
    %v693 = vsel %vm668, 1, 0
    %v694 = vsel %vm669, 1, 0
    %v695 = vsel %vm670, 1, 0
    %v696 = vsel %vm671, 1, 0
    %v697 = vsel %vm672, 1, 0
    %v698 = vsel %vm673, 1, 0
    %v699 = vsel %vm674, 1, 0
    %v700 = vsel %vm675, 1, 0
    %v701 = vsel %vm676, 1, 0
    %v702 = vsel %vm677, 1, 0
    %v703 = vsel %vm678, 1, 0
    %v704 = vsel %vm679, 1, 0
    %v705 = vsel %vm680, 1, 0
    %v706 = vsel %vm681, 1, 0
    %v707 = vsel %vm682, 1, 0
    %v708 = vsel %vm683, 1, 0
    %v709 = vsel %vm684, 1, 0
    %v710 = vsel %vm685, 1, 0
    %v711 = vsel %vm686, 1, 0
    %v712 = vsel %vm687, 1, 0
    %v713 = vsel %vm688, 1, 0
    %v714 = vsel %vm689, 1, 0
    %v715 = vsel %vm690, 1, 0
    %v716 = vsel %vm691, 1, 0
    %v717 = vsel %vm692, 1, 0
    %vm718 = vcmask 7168
    %v719 = vsel %vm718, %v693, 0
    %v720 = vsel %vm718, %v694, 0
    %v721 = vsel %vm718, %v695, 0
    %v722 = vsel %vm718, %v696, 0
    %v723 = vsel %vm718, %v697, 0
    %v724 = vadd.s32 %v719, %v723
    %v725 = vsel %vm718, %v698, 0
    %v726 = vadd.s32 %v720, %v725
    %v727 = vsel %vm718, %v699, 0
    %v728 = vadd.s32 %v721, %v727
    %v729 = vsel %vm718, %v700, 0
    %v730 = vadd.s32 %v722, %v729
    %v731 = vsel %vm718, %v701, 0
    %v732 = vadd.s32 %v724, %v731
    %v733 = vsel %vm718, %v702, 0
    %v734 = vadd.s32 %v726, %v733
    %v735 = vsel %vm718, %v703, 0
    %v736 = vadd.s32 %v728, %v735
    %v737 = vsel %vm718, %v704, 0
    %v738 = vadd.s32 %v730, %v737
    %v739 = vsel %vm718, %v705, 0
    %v740 = vadd.s32 %v732, %v739
    %v741 = vsel %vm718, %v706, 0
    %v742 = vadd.s32 %v734, %v741
    %v743 = vsel %vm718, %v707, 0
    %v744 = vadd.s32 %v736, %v743
    %v745 = vsel %vm718, %v708, 0
    %v746 = vadd.s32 %v738, %v745
    %v747 = vsel %vm718, %v709, 0
    %v748 = vadd.s32 %v740, %v747
    %v749 = vsel %vm718, %v710, 0
    %v750 = vadd.s32 %v742, %v749
    %v751 = vsel %vm718, %v711, 0
    %v752 = vadd.s32 %v744, %v751
    %v753 = vsel %vm718, %v712, 0
    %v754 = vadd.s32 %v746, %v753
    %v755 = vsel %vm718, %v713, 0
    %v756 = vadd.s32 %v748, %v755
    %v757 = vsel %vm718, %v714, 0
    %v758 = vadd.s32 %v750, %v757
    %v759 = vsel %vm718, %v715, 0
    %v760 = vadd.s32 %v752, %v759
    %v761 = vsel %vm718, %v716, 0
    %v762 = vadd.s32 %v754, %v761
    %v763 = vsel %vm718, %v717, 0
    %v764 = vadd.s32 %v756, %v763
    %v765 = vadd.s32 %v764, %v758
    %v766 = vadd.s32 %v760, %v762
    %v767 = vadd.s32 %v765, %v766
    %v768 = vand.u32 %v767, 65535
    %v769 = vshrl.u32 %v767, 16
    %v770 = vcvt.s32.f32 %v768
    %v771 = vcvt.s32.f32 %v769
    %772 = vadd.xlane.f32.xlu0 %v770
    %v773 = vpop.xlane.xlu0 %772
    %774 = vadd.xlane.f32.xlu0 %v771
    %v775 = vpop.xlane.xlu0 %774
    %v776 = vcvt.f32.s32 %v773
    %v777 = vcvt.f32.s32 %v775
    %v778 = vshll.u32 %v777, 16
    %v779 = vadd.s32 %v778, %v776
    %v780 = vrot.slane %v779, 4
    %v781 = vadd.s32 %v779, %v780
    %v782 = vrot.slane %v781, 2
    %v783 = vadd.s32 %v781, %v782
    %v784 = vrot.slane %v783, 1
    %v785 = vadd.s32 %v783, %v784
    %s786 = vtos %v785
    %s787 = scalar_lea.smem [#allocation2], 0
    %788 = sst [smem:[%s787]] %s786
    // Predicated region
    $region10: #{tpu_custom_call.1} parent=1 // pred_check
      _
    $region11: #{tpu_custom_call.1} parent=1 // pred_check_branch
      %790 = sbr.rel (0) target = $region13
    $region12: #{tpu_custom_call.1} parent=1 // pred_region
      %s792 = ssub.s32 16, 16
      %793 = vsyncadd [#allocation3], %s792
      %796 = dma.smem_to_hbm [#allocation2], 16, %s2, [#allocation3]
    $region13: #{tpu_custom_call.1} parent=1 // pred_fallthru
      _
    // Predicated region
    $region14: #{tpu_custom_call.1} parent=1 // pred_check
      _
    $region15: #{tpu_custom_call.1} parent=1 // pred_check_branch
      %798 = sbr.rel (0) target = $region17
    $region16: #{tpu_custom_call.1} parent=1 // pred_region
      %799 = dma.done [#allocation3], 16
    $region17: #{tpu_custom_call.1} parent=1 // pred_fallthru
      _
    %800 = sfence
    %801 = vsyncpa [#allocation3], 1

</llo_original>
